<compile_context>
chip_gen: v7x
topology: tpu7x:2x2x1
jax: 0.10.0
libtpu: 0.0.40
codegen_flags: <defaults>
</compile_context>

<pallas_src>
import jax
import jax.numpy as jnp
from jax.experimental import pallas as pl
from jax.experimental.pallas import tpu as pltpu


def _round_up(x, m):
    return (x + m - 1) // m * m


# ----------------------------------------------------------------------------
# Fused ReID feature kernel.
#   grid = (M tiles, 2 head halves, K steps)   (K innermost = reduction)
#   x   : (2, tm, tk)  bf16   layer 0 = original crop rows, layer 1 = flipped
#   w   : (tk, F)      bf16   one head's weight columns (Normalize folded in)
#   b   : (1, F)       f32    one head's bias (Normalize folded in)
#   out : (tm, F)      f32    flip-summed, twice-L2-normalized head features
#   acc : (2, tm, F)   f32    VMEM accumulator (per flip) across K steps
# ----------------------------------------------------------------------------
def _feature_kernel(x_ref, w_ref, b_ref, out_ref, acc_ref):
    k = pl.program_id(2)

    @pl.when(k == 0)
    def _init():
        acc_ref[...] = jnp.zeros_like(acc_ref)

    # Two MXU matmuls per K step (original rows, flipped rows) against the
    # same resident (tk, F) weight tile.
    w = w_ref[...]
    acc_ref[0] += jnp.dot(x_ref[0], w, preferred_element_type=jnp.float32)
    acc_ref[1] += jnp.dot(x_ref[1], w, preferred_element_type=jnp.float32)

    @pl.when(k == pl.num_programs(2) - 1)
    def _finalize():
        b = b_ref[...]                       # (1, F), added exactly once

        def _l2(v):
            # rsqrt -> EUP slot; multiply -> VPU. eps guards padded zero rows.
            return v * jax.lax.rsqrt(
                jnp.sum(v * v, axis=1, keepdims=True) + 1e-12)

        # torch path per head: norm(flip0) + norm(flip1), then norm again.
        ff = _l2(_l2(acc_ref[0] + b) + _l2(acc_ref[1] + b))
        out_ref[...] = ff.astype(out_ref.dtype)


def feature_call(x2, w, b, *, feat, tm_max=1024, tk=2048):
    """x2: (2, N, D) bf16, w: (D, 2*feat) bf16, b: (1, 2*feat) f32 -> (N, 2*feat) f32."""
    two, n, d = x2.shape
    assert two == 2
    out_cols = w.shape[1]
    assert out_cols == 2 * feat and b.shape == (1, out_cols)
    assert feat % 128 == 0

    # M tile: whole crop batch in ONE tile whenever possible so the weight
    # slab is streamed from HBM exactly once.  Round rows to 16 (bf16 packed
    # (16,128) sublane tiles).
    n_pad = _round_up(max(n, 16), 16)
    tm = min(tm_max, n_pad)
    n_pad = _round_up(n_pad, tm)

    # K tile: multiple of 128 lanes, no larger than (padded) D.
    tk = max(128, min(tk, _round_up(d, 128)))
    tk = _round_up(tk, 128)
    d_pad = _round_up(d, tk)

    if (n_pad, d_pad) != (n, d):
        x2 = jnp.pad(x2, ((0, 0), (0, n_pad - n), (0, d_pad - d)))
    if d_pad != d:
        w = jnp.pad(w, ((0, d_pad - d), (0, 0)))

    grid = (n_pad // tm, 2, d_pad // tk)   # (M tiles, head halves, K steps)

    out = pl.pallas_call(
        _feature_kernel,
        out_shape=jax.ShapeDtypeStruct((n_pad, out_cols), jnp.float32),
        grid_spec=pltpu.PrefetchScalarGridSpec(
            num_scalar_prefetch=0,
            grid=grid,
            in_specs=[
                # original + flipped crop rows
                pl.BlockSpec((2, tm, tk), lambda i, j, k: (0, i, k)),
                # one head's weight columns (the dominant HBM stream)
                pl.BlockSpec((tk, feat), lambda i, j, k: (k, j)),
                # one head's bias
                pl.BlockSpec((1, feat), lambda i, j, k: (0, j)),
            ],
            out_specs=pl.BlockSpec((tm, feat), lambda i, j, k: (i, j)),
            scratch_shapes=[pltpu.VMEM((2, tm, feat), jnp.float32)],
        ),
        compiler_params=pltpu.CompilerParams(
            # head axis is 'parallel' so v7x's two TensorCores each stream
            # half the weight slab; K is the accumulation axis.
            dimension_semantics=("parallel", "parallel", "arbitrary"),
            vmem_limit_bytes=40 * 1024 * 1024,
        ),
    )(x2, w, b)
    return out[:n]


# ----------------------------------------------------------------------------
# One-time parameter folding (wrapper side, not a kernel):
#   * concat the two 512-d heads -> (D, 1024)
#   * fold Normalize(mean, std)  -> W' = W / std_c,  b' = b - (m/s) @ W
#   * cast weights to bf16 (f32 MXU accumulation in the kernel)
# (No flip-folded weight columns anymore: the flip lives on the activation
#  rows, keeping the dominant weight stream at (D, 1024).)
# ----------------------------------------------------------------------------
def fold_reid_params(params, c, h, w):
    w0, b0, w1, b1 = params["w0"], params["b0"], params["w1"], params["b1"]
    mean = params["mean"].reshape(-1)     # (C,)
    std = params["std"].reshape(-1)       # (C,)
    feat = w0.shape[1]

    w_all = jnp.concatenate([w0, w1], axis=1)                     # (D, 2F)
    b_all = jnp.concatenate([b0, b1], axis=1)                     # (1, 2F)

    # Fold Normalize: ((x - m) / s) @ W + b == x @ (W / s) + (b - (m/s) @ W).
    inv_std_vec = jnp.repeat(1.0 / std, h * w)                    # (D,) per-row 1/std_c
    mean_vec = jnp.repeat(mean, h * w)                            # (D,) per-row mean_c
    w_eff = w_all * inv_std_vec[:, None]
    b_eff = b_all - jnp.dot((mean_vec * inv_std_vec)[None, :], w_all)

    out = dict(params)
    out["w_eff"] = w_eff.astype(jnp.bfloat16)
    out["b_eff"] = b_eff.astype(jnp.float32)
    out["feat"] = feat
    out["chw"] = (c, h, w)
    return out


# ----------------------------------------------------------------------------
# Wrapper mimicking REID_model_mot.forward: for each image's batch of
# box-crops produce (n_boxes, 1024) flip-summed, half-normalized features.
# All crops from all images are stacked into ONE kernel call; the horizontal
# flip becomes a second (cheap) activation layer rather than extra weight
# columns, so the weight slab crosses HBM exactly once.
# ----------------------------------------------------------------------------
def reid_model_mot_forward(crop_batches, params, *, tk=2048):
    if not crop_batches:
        return []
    c, h, w = params["chw"]
    feat = params["feat"]
    counts = [int(cb.shape[0]) for cb in crop_batches]
    total = sum(counts)
    if total == 0:
        return [jnp.zeros((0, 2 * feat), jnp.float32) for _ in crop_batches]

    crops = jnp.concatenate(crop_batches, axis=0)                      # (N, C, H, W)
    x_orig = crops.reshape(total, c * h * w)
    x_flip = jnp.flip(crops, axis=3).reshape(total, c * h * w)         # fliplr (width axis)
    x2 = jnp.stack([x_orig, x_flip], axis=0).astype(jnp.bfloat16)      # (2, N, D)

    ff = feature_call(x2, params["w_eff"], params["b_eff"],
                      feat=feat, tk=tk)

    outs, start = [], 0
    for n_i in counts:
        outs.append(ff[start:start + n_i])
        start += n_i
    return outs


def make_params(key, c, h, w, feat=512):
    d = c * h * w
    k0, k1, k2, k3 = jax.random.split(key, 4)
    scale = float(d) ** -0.5
    return dict(
        w0=jax.random.normal(k0, (d, feat), jnp.float32) * scale,
        b0=jax.random.normal(k1, (1, feat), jnp.float32) * 0.01,
        w1=jax.random.normal(k2, (d, feat), jnp.float32) * scale,
        b1=jax.random.normal(k3, (1, feat), jnp.float32) * 0.01,
        mean=jnp.array([0.485, 0.456, 0.406], jnp.float32),
        std=jnp.array([0.229, 0.224, 0.225], jnp.float32),
    )


# Pure-JAX reference of the original (un-folded) forward path, f32.
def reference_forward(crops, p, feat=512):
    n, c, h, w = crops.shape
    mean = p["mean"].reshape(1, c, 1, 1)
    std = p["std"].reshape(1, c, 1, 1)
    x = (crops - mean) / std

    def heads(xi):
        xf = xi.reshape(n, -1)
        y0 = xf @ p["w0"] + p["b0"]
        y1 = xf @ p["w1"] + p["b1"]
        n0 = y0 / jnp.linalg.norm(y0, axis=1, keepdims=True)
        n1 = y1 / jnp.linalg.norm(y1, axis=1, keepdims=True)
        return jnp.concatenate([n0, n1], axis=1)

    ff = heads(x) + heads(jnp.flip(x, axis=3))
    ff0 = ff[:, :feat] / jnp.linalg.norm(ff[:, :feat], axis=1, keepdims=True)
    ff1 = ff[:, feat:] / jnp.linalg.norm(ff[:, feat:], axis=1, keepdims=True)
    return jnp.concatenate([ff0, ff1], axis=1)


if __name__ == "__main__":
    key = jax.random.PRNGKey(0)
    C, H, W = 3, 16, 8            # small "resized" crop size, RGB
    FEAT = 512
    k_a, k_b, k_par = jax.random.split(key, 3)

    # Two images' worth of synthetic box-crops (already "decoded + cropped +
    # resized + ToTensor").
    crops_a = jax.random.uniform(k_a, (8, C, H, W), dtype=jnp.float32)
    crops_b = jax.random.uniform(k_b, (5, C, H, W), dtype=jnp.float32)

    params = make_params(k_par, C, H, W, feat=FEAT)
    params = fold_reid_params(params, C, H, W)

    # tk=128 at the toy D=384 gives a 3-step K loop (exercises the
    # init / accumulate / finalize pipeline); at real sizes use the default tk.
    feats = reid_model_mot_forward([crops_a, crops_b], params, tk=128)
    feats = [jax.block_until_ready(f) for f in feats]

    for crops, out in zip([crops_a, crops_b], feats):
        n = crops.shape[0]
        assert out.shape == (n, 2 * FEAT) and out.dtype == jnp.float32

        # each 512-half is unit-norm, as in the torch forward
        h0n = jnp.linalg.norm(out[:, :FEAT], axis=1)
        h1n = jnp.linalg.norm(out[:, FEAT:], axis=1)
        assert bool(jnp.allclose(h0n, 1.0, atol=1e-3))
        assert bool(jnp.allclose(h1n, 1.0, atol=1e-3))

        # matches the un-folded f32 reference (bf16 weights -> relaxed tol)
        ref = reference_forward(crops, params, feat=FEAT)
        max_err = float(jnp.max(jnp.abs(out - ref)))
        assert max_err < 2e-2, f"max abs err {max_err}"

    print("KERNEL_OK")
</pallas_src>

<mosaic_0001>
module attributes {stable_mosaic.version = 11 : i64} {
  func.func @_feature_kernel(%arg0: i32, %arg1: i32, %arg2: i32, %arg3: memref<2x16x128xbf16, #tpu.memory_space<vmem>>, %arg4: memref<128x512xbf16, #tpu.memory_space<vmem>>, %arg5: memref<1x512xf32, #tpu.memory_space<vmem>>, %arg6: memref<16x512xf32, #tpu.memory_space<vmem>>, %arg7: memref<2x16x512xf32, #tpu.memory_space<vmem>>) attributes {dimension_semantics = [#tpu.dimension_semantics<parallel>, #tpu.dimension_semantics<parallel>, #tpu.dimension_semantics<arbitrary>], iteration_bounds = array<i64: 1, 2, 3>, scalar_prefetch = 0 : i64, scratch_operands = 1 : i64, tpu.core_type = #tpu.core_type<tc>, window_params = [{transform_indices = @transform_0, window_bounds = array<i64: 2, 16, 128>}, {transform_indices = @transform_1, window_bounds = array<i64: 128, 512>}, {transform_indices = @transform_2, window_bounds = array<i64: 1, 512>}, {transform_indices = @transform_3, window_bounds = array<i64: 16, 512>}]} {
    %c0_i32 = arith.constant 0 : i32
    %0 = arith.cmpi eq, %arg2, %c0_i32 : i32
    %1 = arith.extui %0 : i1 to i32
    %c0_i32_0 = arith.constant 0 : i32
    %2 = arith.cmpi ne, %1, %c0_i32_0 : i32
    scf.if %2 {
      %cst_21 = arith.constant 0.000000e+00 : f32
      %25 = vector.broadcast %cst_21 : f32 to vector<2x16x512xf32>
      %c0_22 = arith.constant 0 : index
      %c0_23 = arith.constant 0 : index
      %c0_24 = arith.constant 0 : index
      %26 = vector.load %arg7[%c0_22, %c0_23, %c0_24] : memref<2x16x512xf32, #tpu.memory_space<vmem>>, vector<2x16x512xf32>
      tpu.vector_store %arg7[%c0_22, %c0_23, %c0_24], %25 {strides = array<i32>} : memref<2x16x512xf32, #tpu.memory_space<vmem>>, vector<2x16x512xf32>,
    } else {
    }
    %c0 = arith.constant 0 : index
    %c0_1 = arith.constant 0 : index
    %3 = vector.load %arg4[%c0, %c0_1] : memref<128x512xbf16, #tpu.memory_space<vmem>>, vector<128x512xbf16>
    %c0_2 = arith.constant 0 : index
    %c0_3 = arith.constant 0 : index
    %c0_4 = arith.constant 0 : index
    %4 = vector.load %arg7[%c0_2, %c0_3, %c0_4] : memref<2x16x512xf32, #tpu.memory_space<vmem>>, vector<1x16x512xf32>
    %5 = vector.shape_cast %4 : vector<1x16x512xf32> to vector<16x512xf32>
    %c0_5 = arith.constant 0 : index
    %c0_6 = arith.constant 0 : index
    %c0_7 = arith.constant 0 : index
    %6 = vector.load %arg3[%c0_5, %c0_6, %c0_7] : memref<2x16x128xbf16, #tpu.memory_space<vmem>>, vector<1x16x128xbf16>
    %7 = vector.shape_cast %6 : vector<1x16x128xbf16> to vector<16x128xbf16>
    %cst = arith.constant dense<0.000000e+00> : vector<16x512xf32>
    %8 = tpu.matmul %7, %3, %cst {dimension_numbers = #tpu.dot_dimension_numbers<[1], [0], [0], [1], [0, 0, 1, 1], [], []>} : vector<16x128xbf16>, vector<128x512xbf16>, vector<16x512xf32> -> vector<16x512xf32>
    %9 = arith.addf %5, %8 : vector<16x512xf32>
    %c0_8 = arith.constant 0 : index
    %c0_9 = arith.constant 0 : index
    %c0_10 = arith.constant 0 : index
    %10 = vector.load %arg7[%c0_8, %c0_9, %c0_10] : memref<2x16x512xf32, #tpu.memory_space<vmem>>, vector<1x16x512xf32>
    %11 = vector.shape_cast %10 : vector<1x16x512xf32> to vector<16x512xf32>
    %12 = vector.shape_cast %9 : vector<16x512xf32> to vector<1x16x512xf32>
    tpu.vector_store %arg7[%c0_8, %c0_9, %c0_10], %12 {strides = array<i32>} : memref<2x16x512xf32, #tpu.memory_space<vmem>>, vector<1x16x512xf32>,
    %c1 = arith.constant 1 : index
    %c0_11 = arith.constant 0 : index
    %c0_12 = arith.constant 0 : index
    %13 = vector.load %arg7[%c1, %c0_11, %c0_12] : memref<2x16x512xf32, #tpu.memory_space<vmem>>, vector<1x16x512xf32>
    %14 = vector.shape_cast %13 : vector<1x16x512xf32> to vector<16x512xf32>
    %c1_13 = arith.constant 1 : index
    %c0_14 = arith.constant 0 : index
    %c0_15 = arith.constant 0 : index
    %15 = vector.load %arg3[%c1_13, %c0_14, %c0_15] : memref<2x16x128xbf16, #tpu.memory_space<vmem>>, vector<1x16x128xbf16>
    %16 = vector.shape_cast %15 : vector<1x16x128xbf16> to vector<16x128xbf16>
    %cst_16 = arith.constant dense<0.000000e+00> : vector<16x512xf32>
    %17 = tpu.matmul %16, %3, %cst_16 {dimension_numbers = #tpu.dot_dimension_numbers<[1], [0], [0], [1], [0, 0, 1, 1], [], []>} : vector<16x128xbf16>, vector<128x512xbf16>, vector<16x512xf32> -> vector<16x512xf32>
    %18 = arith.addf %14, %17 : vector<16x512xf32>
    %c1_17 = arith.constant 1 : index
    %c0_18 = arith.constant 0 : index
    %c0_19 = arith.constant 0 : index
    %19 = vector.load %arg7[%c1_17, %c0_18, %c0_19] : memref<2x16x512xf32, #tpu.memory_space<vmem>>, vector<1x16x512xf32>
    %20 = vector.shape_cast %19 : vector<1x16x512xf32> to vector<16x512xf32>
    %21 = vector.shape_cast %18 : vector<16x512xf32> to vector<1x16x512xf32>
    tpu.vector_store %arg7[%c1_17, %c0_18, %c0_19], %21 {strides = array<i32>} : memref<2x16x512xf32, #tpu.memory_space<vmem>>, vector<1x16x512xf32>,
    %c2_i32 = arith.constant 2 : i32
    %22 = arith.cmpi eq, %arg2, %c2_i32 : i32
    %23 = arith.extui %22 : i1 to i32
    %c0_i32_20 = arith.constant 0 : i32
    %24 = arith.cmpi ne, %23, %c0_i32_20 : i32
    scf.if %24 {
      %c0_21 = arith.constant 0 : index
      %c0_22 = arith.constant 0 : index
      %25 = vector.load %arg5[%c0_21, %c0_22] : memref<1x512xf32, #tpu.memory_space<vmem>>, vector<1x512xf32>
      %c0_23 = arith.constant 0 : index
      %c0_24 = arith.constant 0 : index
      %c0_25 = arith.constant 0 : index
      %26 = vector.load %arg7[%c0_23, %c0_24, %c0_25] : memref<2x16x512xf32, #tpu.memory_space<vmem>>, vector<1x16x512xf32>
      %27 = vector.shape_cast %26 : vector<1x16x512xf32> to vector<16x512xf32>
      %28 = vector.broadcast %25 : vector<1x512xf32> to vector<16x512xf32>
      %29 = arith.addf %27, %28 : vector<16x512xf32>
      %30 = arith.mulf %29, %29 : vector<16x512xf32>
      %cst_26 = arith.constant dense<0.000000e+00> : vector<16xf32>
      %31 = vector.multi_reduction <add>, %30, %cst_26 [1] : vector<16x512xf32> to vector<16xf32>
      %32 = vector.shape_cast %31 : vector<16xf32> to vector<16x1xf32>
      %cst_27 = arith.constant 9.99999996E-13 : f32
      %33 = vector.broadcast %cst_27 : f32 to vector<16x1xf32>
      %34 = arith.addf %32, %33 : vector<16x1xf32>
      %35 = math.rsqrt %34 : vector<16x1xf32>
      %36 = vector.broadcast %35 : vector<16x1xf32> to vector<16x512xf32>
      %37 = arith.mulf %29, %36 : vector<16x512xf32>
      %c1_28 = arith.constant 1 : index
      %c0_29 = arith.constant 0 : index
      %c0_30 = arith.constant 0 : index
      %38 = vector.load %arg7[%c1_28, %c0_29, %c0_30] : memref<2x16x512xf32, #tpu.memory_space<vmem>>, vector<1x16x512xf32>
      %39 = vector.shape_cast %38 : vector<1x16x512xf32> to vector<16x512xf32>
      %40 = vector.broadcast %25 : vector<1x512xf32> to vector<16x512xf32>
      %41 = arith.addf %39, %40 : vector<16x512xf32>
      %42 = arith.mulf %41, %41 : vector<16x512xf32>
      %cst_31 = arith.constant dense<0.000000e+00> : vector<16xf32>
      %43 = vector.multi_reduction <add>, %42, %cst_31 [1] : vector<16x512xf32> to vector<16xf32>
      %44 = vector.shape_cast %43 : vector<16xf32> to vector<16x1xf32>
      %cst_32 = arith.constant 9.99999996E-13 : f32
      %45 = vector.broadcast %cst_32 : f32 to vector<16x1xf32>
      %46 = arith.addf %44, %45 : vector<16x1xf32>
      %47 = math.rsqrt %46 : vector<16x1xf32>
      %48 = vector.broadcast %47 : vector<16x1xf32> to vector<16x512xf32>
      %49 = arith.mulf %41, %48 : vector<16x512xf32>
      %50 = arith.addf %37, %49 : vector<16x512xf32>
      %51 = arith.mulf %50, %50 : vector<16x512xf32>
      %cst_33 = arith.constant dense<0.000000e+00> : vector<16xf32>
      %52 = vector.multi_reduction <add>, %51, %cst_33 [1] : vector<16x512xf32> to vector<16xf32>
      %53 = vector.shape_cast %52 : vector<16xf32> to vector<16x1xf32>
      %cst_34 = arith.constant 9.99999996E-13 : f32
      %54 = vector.broadcast %cst_34 : f32 to vector<16x1xf32>
      %55 = arith.addf %53, %54 : vector<16x1xf32>
      %56 = math.rsqrt %55 : vector<16x1xf32>
      %57 = vector.broadcast %56 : vector<16x1xf32> to vector<16x512xf32>
      %58 = arith.mulf %50, %57 : vector<16x512xf32>
      %c0_35 = arith.constant 0 : index
      %c0_36 = arith.constant 0 : index
      %59 = vector.load %arg6[%c0_35, %c0_36] : memref<16x512xf32, #tpu.memory_space<vmem>>, vector<16x512xf32>
      tpu.vector_store %arg6[%c0_35, %c0_36], %58 {strides = array<i32>} : memref<16x512xf32, #tpu.memory_space<vmem>>, vector<16x512xf32>,
    } else {
    }
    return
  }
  func.func @transform_0(%arg0: i32, %arg1: i32, %arg2: i32) -> (i32, i32, i32) {
    %c0_i32 = arith.constant 0 : i32
    %c0_i32_0 = arith.constant 0 : i32
    return %c0_i32, %arg0, %arg2 : i32, i32, i32
  }
  func.func @transform_1(%arg0: i32, %arg1: i32, %arg2: i32) -> (i32, i32) {
    %c0_i32 = arith.constant 0 : i32
    return %arg2, %arg1 : i32, i32
  }
  func.func @transform_2(%arg0: i32, %arg1: i32, %arg2: i32) -> (i32, i32) {
    %c0_i32 = arith.constant 0 : i32
    %c0_i32_0 = arith.constant 0 : i32
    return %c0_i32, %arg1 : i32, i32
  }
  func.func @transform_3(%arg0: i32, %arg1: i32, %arg2: i32) -> (i32, i32) {
    %c0_i32 = arith.constant 0 : i32
    return %arg0, %arg1 : i32, i32
  }
}

</mosaic_0001>

<llo_original>
// kernel: tpu_custom_call.1
$region0: #{tpu_custom_call.1}
  #allocation0 [shape = 'u32[]', space=smem, size = 0x4, offset = 0x4, fixed_abs, tag = 'smem constant byte address 0x4 - core index']
  #allocation1 [shape = 'u32[144,128]{1,0:T(1,128)}', space=vmem, size = 0x12000, scoped, tag = 'internal scratch']
  #allocation2 [shape = 'f32[2,16,512]{2,1,0:T(8,128)}', space=vmem, size = 0x10000, scoped, tag = 'scratch operand']
  %s0 = inlined_call_operand.hbm [shape: bf16[2,16,384], index: 0, kind: input, shape index: {}]
  %s1 = inlined_call_operand.hbm [shape: bf16[384,1024], index: 1, kind: input, shape index: {}]
  %s2 = inlined_call_operand.hbm [shape: f32[1,1024], index: 2, kind: input, shape index: {}]
  %s3 = inlined_call_operand.hbm [shape: f32[16,1024], index: 3, kind: output, shape index: {}]
  %s4 = sld [smem:[#allocation0]]
  $region65: #{tpu_custom_call.1} parent=0
    _
  %s6 = ssub.s32 1, %s4
  %s7 = scalar_select 0, %s6, %s4
  $region1: #{tpu_custom_call.1} parent=0
    #allocation3 [shape = 'u8[16384]{0}', space=vmem, size = 0x4000, scoped, tag = 'input window, operand 0']
    #allocation4 [shape = 's32[2]{0}', space=sflag, size = 0x8, scoped, tag = 'scoped memory for tpu_custom_call.1']
    #allocation5 [shape = 's32[2]{0}', space=sflag, size = 0x8, scoped, tag = 'scoped memory for tpu_custom_call.1']
    #allocation6 [shape = 'u8[262144]{0}', space=vmem, size = 0x40000, scoped, tag = 'input window, operand 1']
    #allocation7 [shape = 's32[2]{0}', space=sflag, size = 0x8, scoped, tag = 'scoped memory for tpu_custom_call.1']
    #allocation8 [shape = 'u8[4096]{0}', space=vmem, size = 0x1000, scoped, tag = 'input window, operand 2']
    #allocation9 [shape = 'u8[65536]{0}', space=vmem, size = 0x10000, scoped, tag = 'output window, operand 0']
    %8 = vsyncpa [#allocation4], 0
    %s9 = scalar_lea.sflag [#allocation4], 1
    %10 = vsyncpa %s9, 0
    %11 = vsyncpa [#allocation7], 0
    %s12 = scalar_lea.sflag [#allocation7], 1
    %13 = vsyncpa %s12, 0
    %14 = vsyncpa [#allocation5], 0
    %s15 = scalar_lea.sflag [#allocation5], 1
    %16 = vsyncpa %s15, 0
    loop: start=0, step=1, limit=8
    $region2: #{tpu_custom_call.1} parent=1 // loop_pre_header
      _
    $region3: #{tpu_custom_call.1} parent=1 // loop_header
      %s18 = sphi 0, %s22
      %p19 = scmp.ge.s32.totalorder %s18, 8
      %s25 = sphi 0, %s44
      %s26 = sphi 0, %s40
      %s27 = sphi 0, %s36
      %s28 = sphi 0, %s25
      %s29 = sphi 0, %s26
      %s30 = sphi 0, %s27
      %s31 = sphi 0, %s28
      %s32 = sphi 0, %s29
      %s33 = sphi 0, %s30
      %s49 = sphi 0, %s51
      %s52 = sphi 0, %s49
      %s53 = sphi 0, %s52
      %s69 = sphi 0, %s53
      %s77 = sphi 0, %s79
      %s80 = sphi 0, %s77
      %s81 = sphi 0, %s80
      %s97 = sphi 0, %s81
      %s103 = sphi 0, %s105
      %s106 = sphi 0, %s103
      %s107 = sphi 0, %s106
      %s123 = sphi 0, %s107
      %s131 = sphi 0, %s133
      %s134 = sphi 0, %s131
      %s135 = sphi 0, %s134
      %s151 = sphi 0, %s135
    $region4: #{tpu_custom_call.1} parent=1 // loop_header_branch
      %21 = sbr.rel (%p19) target = $region8
    $region5: #{tpu_custom_call.1} parent=1 // loop_body
      %s23 = ssub.s32 %s18, 1
      %s24 = ssub.s32 %s18, 2
      %s34 = sadd.s32 1, %s27
      %p35 = scmp.ge.s32.totalorder %s34, 3
      %s36 = scalar_select %p35, 0, %s34
      %s37 = sadd.s32 1, %s26
      %s38 = scalar_select %p35, %s37, %s26
      %p39 = scmp.ge.s32.totalorder %s38, 2
      %s40 = scalar_select %p39, 0, %s38
      %s41 = sadd.s32 1, %s25
      %s42 = scalar_select %p39, %s41, %s25
      %p43 = scmp.ge.s32.totalorder %s42, 1
      %s44 = scalar_select %p43, 0, %s42
      %s45 = ssub.s32 %s25, %s44
      %s46 = ssub.s32 %s27, %s36
      %s47 = sor.u32 %s45, %s46
      %p48 = scmp.eq.s32.totalorder %s47, 0
      %s50 = sadd.s32 %s49, 1
      %s51 = scalar_select %p48, %s49, %s50
      %p54 = pneg %p48
      %p55 = scmp.eq.s32.totalorder %s18, 5
      %p56 = por %p54, %p55
      %p57 = scmp.ne.s32.totalorder %s49, %s52
      %p58 = scmp.eq.s32.totalorder %s18, 0
      %p59 = por %p57, %p58
      %p60 = scmp.ne.s32.totalorder %s49, %s52
      %p61 = scmp.eq.s32.totalorder %s23, 5
      %p62 = por %p60, %p61
      %p63 = scmp.ne.s32.totalorder %s52, %s53
      %p64 = scmp.eq.s32.totalorder %s23, 0
      %p65 = por %p63, %p64
      %p66 = scmp.ne.s32.totalorder %s52, %s53
      %p67 = scmp.eq.s32.totalorder %s24, 5
      %p68 = por %p66, %p67
      %p70 = scmp.ne.s32.totalorder %s53, %s69
      %p71 = scmp.eq.s32.totalorder %s24, 0
      %p72 = por %p70, %p71
      %s73 = ssub.s32 %s27, %s36
      %s74 = ssub.s32 %s26, %s40
      %s75 = sor.u32 %s73, %s74
      %p76 = scmp.eq.s32.totalorder %s75, 0
      %s78 = sadd.s32 %s77, 1
      %s79 = scalar_select %p76, %s77, %s78
      %p82 = pneg %p76
      %p83 = scmp.eq.s32.totalorder %s18, 5
      %p84 = por %p82, %p83
      %p85 = scmp.ne.s32.totalorder %s77, %s80
      %p86 = scmp.eq.s32.totalorder %s18, 0
      %p87 = por %p85, %p86
      %p88 = scmp.ne.s32.totalorder %s77, %s80
      %p89 = scmp.eq.s32.totalorder %s23, 5
      %p90 = por %p88, %p89
      %p91 = scmp.ne.s32.totalorder %s80, %s81
      %p92 = scmp.eq.s32.totalorder %s23, 0
      %p93 = por %p91, %p92
      %p94 = scmp.ne.s32.totalorder %s80, %s81
      %p95 = scmp.eq.s32.totalorder %s24, 5
      %p96 = por %p94, %p95
      %p98 = scmp.ne.s32.totalorder %s81, %s97
      %p99 = scmp.eq.s32.totalorder %s24, 0
      %p100 = por %p98, %p99
      %s101 = ssub.s32 %s26, %s40
      %p102 = scmp.eq.s32.totalorder %s101, 0
      %s104 = sadd.s32 %s103, 1
      %s105 = scalar_select %p102, %s103, %s104
      %p108 = pneg %p102
      %p109 = scmp.eq.s32.totalorder %s18, 5
      %p110 = por %p108, %p109
      %p111 = scmp.ne.s32.totalorder %s103, %s106
      %p112 = scmp.eq.s32.totalorder %s18, 0
      %p113 = por %p111, %p112
      %p114 = scmp.ne.s32.totalorder %s103, %s106
      %p115 = scmp.eq.s32.totalorder %s23, 5
      %p116 = por %p114, %p115
      %p117 = scmp.ne.s32.totalorder %s106, %s107
      %p118 = scmp.eq.s32.totalorder %s23, 0
      %p119 = por %p117, %p118
      %p120 = scmp.ne.s32.totalorder %s106, %s107
      %p121 = scmp.eq.s32.totalorder %s24, 5
      %p122 = por %p120, %p121
      %p124 = scmp.ne.s32.totalorder %s107, %s123
      %p125 = scmp.eq.s32.totalorder %s24, 0
      %p126 = por %p124, %p125
      %s127 = ssub.s32 %s25, %s44
      %s128 = ssub.s32 %s26, %s40
      %s129 = sor.u32 %s127, %s128
      %p130 = scmp.eq.s32.totalorder %s129, 0
      %s132 = sadd.s32 %s131, 1
      %s133 = scalar_select %p130, %s131, %s132
      %p136 = pneg %p130
      %p137 = scmp.eq.s32.totalorder %s18, 5
      %p138 = por %p136, %p137
      %p139 = scmp.ne.s32.totalorder %s131, %s134
      %p140 = scmp.eq.s32.totalorder %s18, 0
      %p141 = por %p139, %p140
      %p142 = scmp.ne.s32.totalorder %s131, %s134
      %p143 = scmp.eq.s32.totalorder %s23, 5
      %p144 = por %p142, %p143
      %p145 = scmp.ne.s32.totalorder %s134, %s135
      %p146 = scmp.eq.s32.totalorder %s23, 0
      %p147 = por %p145, %p146
      %p148 = scmp.ne.s32.totalorder %s134, %s135
      %p149 = scmp.eq.s32.totalorder %s24, 5
      %p150 = por %p148, %p149
      %p152 = scmp.ne.s32.totalorder %s135, %s151
      %p153 = scmp.eq.s32.totalorder %s24, 0
      %p154 = por %p152, %p153
      %p155 = scmp.le.s32.totalorder 1, %s18
      %p156 = scmp.lt.s32.totalorder %s18, 7
      %p157 = pnand %p155, %p156
      %p158 = pneg %p157
      // Predicated region
      $region9: #{tpu_custom_call.1} parent=5 // pred_check
        _
      $region10: #{tpu_custom_call.1} parent=5 // pred_check_branch
        %160 = sbr.rel (%p157) target = $region12
      $region11: #{tpu_custom_call.1} parent=5 // pred_region
        %s161 = ssub.s32 %s18, 1
      $region12: #{tpu_custom_call.1} parent=5 // pred_fallthru
        _
      %p162 = scmp.lt.s32.totalorder %s18, 6
      // Predicated region
      $region13: #{tpu_custom_call.1} parent=5 // pred_check
        %p163 = pneg %p162
      $region14: #{tpu_custom_call.1} parent=5 // pred_check_branch
        %165 = sbr.rel (%p163) target = $region16
      $region15: #{tpu_custom_call.1} parent=5 // pred_region
        // Predicated region
        $region17: #{tpu_custom_call.1} parent=15 // pred_check
          %p166 = pneg %p59
        $region18: #{tpu_custom_call.1} parent=15 // pred_check_branch
          %168 = sbr.rel (%p166) target = $region20
        $region19: #{tpu_custom_call.1} parent=15 // pred_region
          %s169 = sand.u32 %s49, 1
          %s170 = scalar_lea.sflag [#allocation4], %s169
          %s171 = sand.u32 %s49, 1
          %s172 = smul.addr %s171, 16
          %s173 = scalar_lea.vmem [#allocation3], %s172
          %s174 = smul.u32 2, %s25
          %s176 = ssub.s32 256, 256
          %177 = vsyncadd %s170, %s176
          %s178 = smul.addr %s174, 3
          %s179 = sadd.s32 %s27, %s178
          %s180 = smul.addr %s179, 64
          %s181 = scalar_lea.hbm %s0, %s180
          %s182 = sshll.u32 %s173, 4
          %s183 = int_to_ptr.vmem [resolvable:$true] %s182
          %188 = dma.hbm_to_vmem [thread:$0]  %s181, 256, %s183, %s170, 192, 64, 4
        $region20: #{tpu_custom_call.1} parent=15 // pred_fallthru
          _
        // Predicated region
        $region21: #{tpu_custom_call.1} parent=15 // pred_check
          %p189 = pneg %p87
        $region22: #{tpu_custom_call.1} parent=15 // pred_check_branch
          %191 = sbr.rel (%p189) target = $region24
        $region23: #{tpu_custom_call.1} parent=15 // pred_region
          %s192 = sand.u32 %s18, 1
          %s193 = scalar_lea.sflag [#allocation7], %s192
          %s194 = sand.u32 %s77, 1
          %s195 = smul.addr %s194, 256
          %s196 = scalar_lea.vmem [#allocation6], %s195
          %s197 = smul.u32 16, %s27
          %s198 = smul.u32 4, %s26
          %s200 = ssub.s32 4096, 4096
          %201 = vsyncadd %s193, %s200
          %s202 = smul.addr %s197, 8
          %s203 = sadd.s32 %s198, %s202
          %s204 = smul.addr %s203, 64
          %s205 = scalar_lea.hbm %s1, %s204
          %s206 = sshll.u32 %s196, 4
          %s207 = int_to_ptr.vmem [resolvable:$true] %s206
          %212 = dma.hbm_to_vmem [thread:$0]  %s205, 4096, %s207, %s193, 512, 256, 16
        $region24: #{tpu_custom_call.1} parent=15 // pred_fallthru
          _
        // Predicated region
        $region25: #{tpu_custom_call.1} parent=15 // pred_check
          %p213 = pneg %p113
        $region26: #{tpu_custom_call.1} parent=15 // pred_check_branch
          %215 = sbr.rel (%p213) target = $region28
        $region27: #{tpu_custom_call.1} parent=15 // pred_region
          %s216 = sand.u32 %s18, 1
          %s217 = scalar_lea.sflag [#allocation7], %s216
          %s218 = sand.u32 %s103, 1
          %s219 = smul.addr %s218, 4
          %s220 = scalar_lea.vmem [#allocation8], %s219
          %s221 = smul.u32 4, %s26
          %s223 = ssub.s32 64, 64
          %224 = vsyncadd %s217, %s223
          %s225 = smul.addr %s221, 16
          %s226 = scalar_lea.hbm %s2, %s225
          %s228 = sshll.u32 %s220, 4
          %s229 = int_to_ptr.vmem [resolvable:$true] %s228
          %231 = dma.hbm_to_vmem [thread:$0]  %s226, 64, %s229, %s217
        $region28: #{tpu_custom_call.1} parent=15 // pred_fallthru
          _
      $region16: #{tpu_custom_call.1} parent=5 // pred_fallthru
        _
      %p232 = scmp.le.s32.totalorder 1, %s18
      %p233 = scmp.lt.s32.totalorder %s18, 7
      %p234 = pnand %p232, %p233
      %p235 = pneg %p234
      // Predicated region
      $region29: #{tpu_custom_call.1} parent=5 // pred_check
        _
      $region30: #{tpu_custom_call.1} parent=5 // pred_check_branch
        %237 = sbr.rel (%p234) target = $region32
      $region31: #{tpu_custom_call.1} parent=5 // pred_region
        %s238 = ssub.s32 %s18, 1
        %s239 = sand.u32 %s52, 1
        %s240 = scalar_lea.sflag [#allocation4], %s239
        %s241 = sand.u32 %s52, 1
        %s242 = smul.addr %s241, 16
        %s243 = scalar_lea.vmem [#allocation3], %s242
        // Predicated region
        $region33: #{tpu_custom_call.1} parent=31 // pred_check
          %p244 = pneg %p65
        $region34: #{tpu_custom_call.1} parent=31 // pred_check_branch
          %246 = sbr.rel (%p244) target = $region36
        $region35: #{tpu_custom_call.1} parent=31 // pred_region
          %247 = dma.done %s240, 256
        $region36: #{tpu_custom_call.1} parent=31 // pred_fallthru
          _
        %s248 = sand.u32 %s23, 1
        %s249 = scalar_lea.sflag [#allocation7], %s248
        %s250 = sand.u32 %s80, 1
        %s251 = smul.addr %s250, 256
        %s252 = scalar_lea.vmem [#allocation6], %s251
        // Predicated region
        $region37: #{tpu_custom_call.1} parent=31 // pred_check
          %p253 = pneg %p93
        $region38: #{tpu_custom_call.1} parent=31 // pred_check_branch
          %255 = sbr.rel (%p253) target = $region40
        $region39: #{tpu_custom_call.1} parent=31 // pred_region
          %256 = dma.done %s249, 4096
        $region40: #{tpu_custom_call.1} parent=31 // pred_fallthru
          _
        %s257 = sand.u32 %s23, 1
        %s258 = scalar_lea.sflag [#allocation7], %s257
        %s259 = sand.u32 %s106, 1
        %s260 = smul.addr %s259, 4
        %s261 = scalar_lea.vmem [#allocation8], %s260
        // Predicated region
        $region41: #{tpu_custom_call.1} parent=31 // pred_check
          %p262 = pneg %p119
        $region42: #{tpu_custom_call.1} parent=31 // pred_check_branch
          %264 = sbr.rel (%p262) target = $region44
        $region43: #{tpu_custom_call.1} parent=31 // pred_region
          %265 = dma.done %s258, 64
        $region44: #{tpu_custom_call.1} parent=31 // pred_fallthru
          _
        %s266 = sand.u32 %s52, 1
        %s267 = scalar_lea.sflag [#allocation4], %s266
        %s268 = sand.u32 %s52, 1
        %s269 = smul.addr %s268, 16
        %s270 = scalar_lea.vmem [#allocation3], %s269
        %p271 = pneg %p65
        %p272 = pneg %p62
        %s273 = sand.u32 %s23, 1
        %s274 = scalar_lea.sflag [#allocation7], %s273
        %s275 = sand.u32 %s80, 1
        %s276 = smul.addr %s275, 256
        %s277 = scalar_lea.vmem [#allocation6], %s276
        %p278 = pneg %p93
        %p279 = pneg %p90
        %s280 = sand.u32 %s23, 1
        %s281 = scalar_lea.sflag [#allocation7], %s280
        %s282 = sand.u32 %s106, 1
        %s283 = smul.addr %s282, 4
        %s284 = scalar_lea.vmem [#allocation8], %s283
        %p285 = pneg %p119
        %p286 = pneg %p116
        %p287 = pneg %p147
        %p288 = pneg %p144
        %s289 = sand.u32 %s134, 1
        %s290 = scalar_lea.sflag [#allocation5], %s289
        %s291 = sand.u32 %s134, 1
        %s292 = smul.addr %s291, 64
        %s293 = scalar_lea.vmem [#allocation9], %s292
        %s294 = smul.u32 2, %s28
        %s295 = smul.u32 16, %s30
        %s296 = smul.u32 4, %s29
        %s297 = smul.u32 4, %s29
        %s298 = smul.u32 2, %s28
        %s299 = smul.u32 4, %s29
        %p301 = scmp.eq.s32.totalorder %s30, 0
        // Predicated region
        $region45: #{tpu_custom_call.1} parent=31 // pred_check
          %p302 = pneg %p301
        $region46: #{tpu_custom_call.1} parent=31 // pred_check_branch
          %304 = sbr.rel (%p302) target = $region48
        $region47: #{tpu_custom_call.1} parent=31 // pred_region
          %305 = vst [vmem:[#allocation2] sm:$0xff] 0.0
          %306 = vst [vmem:[#allocation2 + $0x8] sm:$0xff] 0.0
          %307 = vst [vmem:[#allocation2 + $0x10] sm:$0xff] 0.0
          %308 = vst [vmem:[#allocation2 + $0x18] sm:$0xff] 0.0
          %309 = vst [vmem:[#allocation2 + $0x20] sm:$0xff] 0.0
          %310 = vst [vmem:[#allocation2 + $0x28] sm:$0xff] 0.0
          %311 = vst [vmem:[#allocation2 + $0x30] sm:$0xff] 0.0
          %312 = vst [vmem:[#allocation2 + $0x38] sm:$0xff] 0.0
          %313 = vst [vmem:[#allocation2 + $0x40] sm:$0xff] 0.0
          %314 = vst [vmem:[#allocation2 + $0x48] sm:$0xff] 0.0
          %315 = vst [vmem:[#allocation2 + $0x50] sm:$0xff] 0.0
          %316 = vst [vmem:[#allocation2 + $0x58] sm:$0xff] 0.0
          %317 = vst [vmem:[#allocation2 + $0x60] sm:$0xff] 0.0
          %318 = vst [vmem:[#allocation2 + $0x68] sm:$0xff] 0.0
          %319 = vst [vmem:[#allocation2 + $0x70] sm:$0xff] 0.0
          %320 = vst [vmem:[#allocation2 + $0x78] sm:$0xff] 0.0
        $region48: #{tpu_custom_call.1} parent=31 // pred_fallthru
          _
        %v321 = vld [vmem:[%s252] sm:$0xff]
        %v322 = vld [vmem:[%s252 + $0x8] sm:$0xff]
        %v323 = vld [vmem:[%s252 + $0x10] sm:$0xff]
        %v324 = vld [vmem:[%s252 + $0x18] sm:$0xff]
        %v325 = vld [vmem:[%s252 + $0x20] sm:$0xff]
        %v326 = vld [vmem:[%s252 + $0x28] sm:$0xff]
        %v327 = vld [vmem:[%s252 + $0x30] sm:$0xff]
        %v328 = vld [vmem:[%s252 + $0x38] sm:$0xff]
        %v329 = vld [vmem:[%s252 + $0x40] sm:$0xff]
        %v330 = vld [vmem:[%s252 + $0x48] sm:$0xff]
        %v331 = vld [vmem:[%s252 + $0x50] sm:$0xff]
        %v332 = vld [vmem:[%s252 + $0x58] sm:$0xff]
        %v333 = vld [vmem:[%s252 + $0x60] sm:$0xff]
        %v334 = vld [vmem:[%s252 + $0x68] sm:$0xff]
        %v335 = vld [vmem:[%s252 + $0x70] sm:$0xff]
        %v336 = vld [vmem:[%s252 + $0x78] sm:$0xff]
        %v337 = vld [vmem:[%s252 + $0x80] sm:$0xff]
        %v338 = vld [vmem:[%s252 + $0x88] sm:$0xff]
        %v339 = vld [vmem:[%s252 + $0x90] sm:$0xff]
        %v340 = vld [vmem:[%s252 + $0x98] sm:$0xff]
        %v341 = vld [vmem:[%s252 + $0xa0] sm:$0xff]
        %v342 = vld [vmem:[%s252 + $0xa8] sm:$0xff]
        %v343 = vld [vmem:[%s252 + $0xb0] sm:$0xff]
        %v344 = vld [vmem:[%s252 + $0xb8] sm:$0xff]
        %v345 = vld [vmem:[%s252 + $0xc0] sm:$0xff]
        %v346 = vld [vmem:[%s252 + $0xc8] sm:$0xff]
        %v347 = vld [vmem:[%s252 + $0xd0] sm:$0xff]
        %v348 = vld [vmem:[%s252 + $0xd8] sm:$0xff]
        %v349 = vld [vmem:[%s252 + $0xe0] sm:$0xff]
        %v350 = vld [vmem:[%s252 + $0xe8] sm:$0xff]
        %v351 = vld [vmem:[%s252 + $0xf0] sm:$0xff]
        %v352 = vld [vmem:[%s252 + $0xf8] sm:$0xff]
        %v353 = vld [vmem:[#allocation2] sm:$0xff]
        %v354 = vld [vmem:[#allocation2 + $0x8] sm:$0xff]
        %v355 = vld [vmem:[#allocation2 + $0x10] sm:$0xff]
        %v356 = vld [vmem:[#allocation2 + $0x18] sm:$0xff]
        %v357 = vld [vmem:[#allocation2 + $0x20] sm:$0xff]
        %v358 = vld [vmem:[#allocation2 + $0x28] sm:$0xff]
        %v359 = vld [vmem:[#allocation2 + $0x30] sm:$0xff]
        %v360 = vld [vmem:[#allocation2 + $0x38] sm:$0xff]
        %v361 = vld [vmem:[%s243] sm:$0xf]
        %v362 = vld [vmem:[%s243 + $0x4] sm:$0xf]
        %v365 = vunpack.c.l.b16 %v361
        %v366 = vunpack.c.l.b16 %v362
        %v367 = vpack.c.b16 %v366, %v365
        %v401 = vunpack.c.l.b16 %v321
        %v402 = vunpack.c.h.b16 %v321
        %v403 = vunpack.c.l.b16 %v322
        %v404 = vunpack.c.h.b16 %v322
        %v405 = vunpack.c.l.b16 %v323
        %v406 = vunpack.c.h.b16 %v323
        %v407 = vunpack.c.l.b16 %v324
        %v408 = vunpack.c.h.b16 %v324
        %v409 = vunpack.c.l.b16 %v325
        %v410 = vunpack.c.h.b16 %v325
        %v411 = vunpack.c.l.b16 %v326
        %v412 = vunpack.c.h.b16 %v326
        %v413 = vunpack.c.l.b16 %v327
        %v414 = vunpack.c.h.b16 %v327
        %v415 = vunpack.c.l.b16 %v328
        %v416 = vunpack.c.h.b16 %v328
        %v417 = vunpack.c.l.b16 %v329
        %v418 = vunpack.c.h.b16 %v329
        %v419 = vunpack.c.l.b16 %v330
        %v420 = vunpack.c.h.b16 %v330
        %v421 = vunpack.c.l.b16 %v331
        %v422 = vunpack.c.h.b16 %v331
        %v423 = vunpack.c.l.b16 %v332
        %v424 = vunpack.c.h.b16 %v332
        %v425 = vunpack.c.l.b16 %v333
        %v426 = vunpack.c.h.b16 %v333
        %v427 = vunpack.c.l.b16 %v334
        %v428 = vunpack.c.h.b16 %v334
        %v429 = vunpack.c.l.b16 %v335
        %v430 = vunpack.c.h.b16 %v335
        %v431 = vunpack.c.l.b16 %v336
        %v432 = vunpack.c.h.b16 %v336
        %v433 = vunpack.c.l.b16 %v337
        %v434 = vunpack.c.h.b16 %v337
        %v435 = vunpack.c.l.b16 %v338
        %v436 = vunpack.c.h.b16 %v338
        %v437 = vunpack.c.l.b16 %v339
        %v438 = vunpack.c.h.b16 %v339
        %v439 = vunpack.c.l.b16 %v340
        %v440 = vunpack.c.h.b16 %v340
        %v441 = vunpack.c.l.b16 %v341
        %v442 = vunpack.c.h.b16 %v341
        %v443 = vunpack.c.l.b16 %v342
        %v444 = vunpack.c.h.b16 %v342
        %v445 = vunpack.c.l.b16 %v343
        %v446 = vunpack.c.h.b16 %v343
        %v447 = vunpack.c.l.b16 %v344
        %v448 = vunpack.c.h.b16 %v344
        %v449 = vunpack.c.l.b16 %v345
        %v450 = vunpack.c.h.b16 %v345
        %v451 = vunpack.c.l.b16 %v346
        %v452 = vunpack.c.h.b16 %v346
        %v453 = vunpack.c.l.b16 %v347
        %v454 = vunpack.c.h.b16 %v347
        %v455 = vunpack.c.l.b16 %v348
        %v456 = vunpack.c.h.b16 %v348
        %v457 = vunpack.c.l.b16 %v349
        %v458 = vunpack.c.h.b16 %v349
        %v459 = vunpack.c.l.b16 %v350
        %v460 = vunpack.c.h.b16 %v350
        %v461 = vunpack.c.l.b16 %v351
        %v462 = vunpack.c.h.b16 %v351
        %v463 = vunpack.c.l.b16 %v352
        %v464 = vunpack.c.h.b16 %v352
        %v465 = vpack.c.b16 %v405, %v401
        %v466 = vpack.c.b16 %v406, %v402
        %v467 = vpack.c.b16 %v407, %v403
        %v468 = vpack.c.b16 %v408, %v404
        %v469 = vpack.c.b16 %v413, %v409
        %v470 = vpack.c.b16 %v414, %v410
        %v471 = vpack.c.b16 %v415, %v411
        %v472 = vpack.c.b16 %v416, %v412
        %v473 = vpack.c.b16 %v421, %v417
        %v474 = vpack.c.b16 %v422, %v418
        %v475 = vpack.c.b16 %v423, %v419
        %v476 = vpack.c.b16 %v424, %v420
        %v477 = vpack.c.b16 %v429, %v425
        %v478 = vpack.c.b16 %v430, %v426
        %v479 = vpack.c.b16 %v431, %v427
        %v480 = vpack.c.b16 %v432, %v428
        %v481 = vpack.c.b16 %v437, %v433
        %v482 = vpack.c.b16 %v438, %v434
        %v483 = vpack.c.b16 %v439, %v435
        %v484 = vpack.c.b16 %v440, %v436
        %v485 = vpack.c.b16 %v445, %v441
        %v486 = vpack.c.b16 %v446, %v442
        %v487 = vpack.c.b16 %v447, %v443
        %v488 = vpack.c.b16 %v448, %v444
        %v489 = vpack.c.b16 %v453, %v449
        %v490 = vpack.c.b16 %v454, %v450
        %v491 = vpack.c.b16 %v455, %v451
        %v492 = vpack.c.b16 %v456, %v452
        %v493 = vpack.c.b16 %v461, %v457
        %v494 = vpack.c.b16 %v462, %v458
        %v495 = vpack.c.b16 %v463, %v459
        %v496 = vpack.c.b16 %v464, %v460
        %529 = vmatprep.subr.bf16.mxu0 %v466
        %530 = vmatpush1.bf16.msra.mxu0 %v465
        %531 = vmatprep.subr.bf16.mxu0 %v470
        %532 = vmatpush1.bf16.msra.mxu0 %v469
        %533 = vmatprep.subr.bf16.mxu0 %v474
        %534 = vmatpush1.bf16.msra.mxu0 %v473
        %535 = vmatprep.subr.bf16.mxu0 %v478
        %536 = vmatpush1.bf16.msra.mxu0 %v477
        %537 = vmatprep.subr.bf16.mxu0 %v482
        %538 = vmatpush1.bf16.msra.mxu0 %v481
        %539 = vmatprep.subr.bf16.mxu0 %v486
        %540 = vmatpush1.bf16.msra.mxu0 %v485
        %541 = vmatprep.subr.bf16.mxu0 %v490
        %542 = vmatpush1.bf16.msra.mxu0 %v489
        %543 = vmatprep.subr.bf16.mxu0 %v494
        %544 = vmatpush1.bf16.msra.mxu0 %v493
        %545 = vmatprep.subr.bf16.mxu0 0
        %546 = vmatpush1.bf16.msra.mxu0 0
        %547 = vmatprep.subr.bf16.mxu0 0
        %548 = vmatpush1.bf16.msra.mxu0 0
        %549 = vmatprep.subr.bf16.mxu0 0
        %550 = vmatpush1.bf16.msra.mxu0 0
        %551 = vmatprep.subr.bf16.mxu0 0
        %552 = vmatpush1.bf16.msra.mxu0 0
        %553 = vmatprep.subr.bf16.mxu0 0
        %554 = vmatpush1.bf16.msra.mxu0 0
        %555 = vmatprep.subr.bf16.mxu0 0
        %556 = vmatpush1.bf16.msra.mxu0 0
        %557 = vmatprep.subr.bf16.mxu0 0
        %558 = vmatpush1.bf16.msra.mxu0 0
        %559 = vmatprep.subr.bf16.mxu0 0
        %560 = vmatpush1.bf16.msra.mxu0 0
        %561 = vmatprep.mubr.bf16.mxu0 0
        %562 = vmatmul.mubr.bf16.gmra.mrb[0].mxu0 %v367
        %v563 = vpop.f32.mrb[0].mxu0
        %v564 = vadd.f32 0.0, %v563
        %v565 = vpop.f32.mrb[0].mxu0
        %v566 = vadd.f32 0.0, %v565
        %v567 = vpop.f32.mrb[0].mxu0
        %v568 = vadd.f32 0.0, %v567
        %v569 = vpop.f32.mrb[0].mxu0
        %v570 = vadd.f32 0.0, %v569
        %571 = vdwg.mxu0
        %572 = vmatprep.subr.bf16.mxu0 %v468
        %573 = vmatpush1.bf16.msra.mxu0 %v467
        %574 = vmatprep.subr.bf16.mxu0 %v472
        %575 = vmatpush1.bf16.msra.mxu0 %v471
        %576 = vmatprep.subr.bf16.mxu0 %v476
        %577 = vmatpush1.bf16.msra.mxu0 %v475
        %578 = vmatprep.subr.bf16.mxu0 %v480
        %579 = vmatpush1.bf16.msra.mxu0 %v479
        %580 = vmatprep.subr.bf16.mxu0 %v484
        %581 = vmatpush1.bf16.msra.mxu0 %v483
        %582 = vmatprep.subr.bf16.mxu0 %v488
        %583 = vmatpush1.bf16.msra.mxu0 %v487
        %584 = vmatprep.subr.bf16.mxu0 %v492
        %585 = vmatpush1.bf16.msra.mxu0 %v491
        %586 = vmatprep.subr.bf16.mxu0 %v496
        %587 = vmatpush1.bf16.msra.mxu0 %v495
        %588 = vmatprep.subr.bf16.mxu0 0
        %589 = vmatpush1.bf16.msra.mxu0 0
        %590 = vmatprep.subr.bf16.mxu0 0
        %591 = vmatpush1.bf16.msra.mxu0 0
        %592 = vmatprep.subr.bf16.mxu0 0
        %593 = vmatpush1.bf16.msra.mxu0 0
        %594 = vmatprep.subr.bf16.mxu0 0
        %595 = vmatpush1.bf16.msra.mxu0 0
        %596 = vmatprep.subr.bf16.mxu0 0
        %597 = vmatpush1.bf16.msra.mxu0 0
        %598 = vmatprep.subr.bf16.mxu0 0
        %599 = vmatpush1.bf16.msra.mxu0 0
        %600 = vmatprep.subr.bf16.mxu0 0
        %601 = vmatpush1.bf16.msra.mxu0 0
        %602 = vmatprep.subr.bf16.mxu0 0
        %603 = vmatpush1.bf16.msra.mxu0 0
        %604 = vmatprep.mubr.bf16.mxu0 0
        %605 = vmatmul.mubr.bf16.gmra.mrb[0].mxu0 %v367
        %v606 = vpop.f32.mrb[0].mxu0
        %v607 = vadd.f32 0.0, %v606
        %v608 = vpop.f32.mrb[0].mxu0
        %v609 = vadd.f32 0.0, %v608
        %v610 = vpop.f32.mrb[0].mxu0
        %v611 = vadd.f32 0.0, %v610
        %v612 = vpop.f32.mrb[0].mxu0
        %v613 = vadd.f32 0.0, %v612
        %614 = vdwg.mxu0
        %v615 = vadd.f32 %v353, %v564
        %v616 = vadd.f32 %v354, %v566
        %v617 = vadd.f32 %v355, %v607
        %v618 = vadd.f32 %v356, %v609
        %v619 = vadd.f32 %v357, %v568
        %v620 = vadd.f32 %v358, %v570
        %v621 = vadd.f32 %v359, %v611
        %v622 = vadd.f32 %v360, %v613
        %623 = vst [vmem:[#allocation2] sm:$0xff] %v615
        %624 = vst [vmem:[#allocation2 + $0x8] sm:$0xff] %v616
        %625 = vst [vmem:[#allocation2 + $0x10] sm:$0xff] %v617
        %626 = vst [vmem:[#allocation2 + $0x18] sm:$0xff] %v618
        %627 = vst [vmem:[#allocation2 + $0x20] sm:$0xff] %v619
        %628 = vst [vmem:[#allocation2 + $0x28] sm:$0xff] %v620
        %629 = vst [vmem:[#allocation2 + $0x30] sm:$0xff] %v621
        %630 = vst [vmem:[#allocation2 + $0x38] sm:$0xff] %v622
        %s631 = scalar_lea.vmem [#allocation2], 64
        %v632 = vld [vmem:[%s631] sm:$0xff]
        %v633 = vld [vmem:[%s631 + $0x8] sm:$0xff]
        %v634 = vld [vmem:[%s631 + $0x10] sm:$0xff]
        %v635 = vld [vmem:[%s631 + $0x18] sm:$0xff]
        %v636 = vld [vmem:[%s631 + $0x20] sm:$0xff]
        %v637 = vld [vmem:[%s631 + $0x28] sm:$0xff]
        %v638 = vld [vmem:[%s631 + $0x30] sm:$0xff]
        %v639 = vld [vmem:[%s631 + $0x38] sm:$0xff]
        %s640 = scalar_lea.vmem %s243, 8 [#allocation3]
        %v641 = vld [vmem:[%s640] sm:$0xf]
        %v642 = vld [vmem:[%s640 + $0x4] sm:$0xf]
        %v645 = vunpack.c.l.b16 %v641
        %v646 = vunpack.c.l.b16 %v642
        %v647 = vpack.c.b16 %v646, %v645
        %649 = vmatprep.subr.bf16.mxu0 %v466
        %650 = vmatpush1.bf16.msra.mxu0 %v465
        %651 = vmatprep.subr.bf16.mxu0 %v470
        %652 = vmatpush1.bf16.msra.mxu0 %v469
        %653 = vmatprep.subr.bf16.mxu0 %v474
        %654 = vmatpush1.bf16.msra.mxu0 %v473
        %655 = vmatprep.subr.bf16.mxu0 %v478
        %656 = vmatpush1.bf16.msra.mxu0 %v477
        %657 = vmatprep.subr.bf16.mxu0 %v482
        %658 = vmatpush1.bf16.msra.mxu0 %v481
        %659 = vmatprep.subr.bf16.mxu0 %v486
        %660 = vmatpush1.bf16.msra.mxu0 %v485
        %661 = vmatprep.subr.bf16.mxu0 %v490
        %662 = vmatpush1.bf16.msra.mxu0 %v489
        %663 = vmatprep.subr.bf16.mxu0 %v494
        %664 = vmatpush1.bf16.msra.mxu0 %v493
        %665 = vmatprep.subr.bf16.mxu0 0
        %666 = vmatpush1.bf16.msra.mxu0 0
        %667 = vmatprep.subr.bf16.mxu0 0
        %668 = vmatpush1.bf16.msra.mxu0 0
        %669 = vmatprep.subr.bf16.mxu0 0
        %670 = vmatpush1.bf16.msra.mxu0 0
        %671 = vmatprep.subr.bf16.mxu0 0
        %672 = vmatpush1.bf16.msra.mxu0 0
        %673 = vmatprep.subr.bf16.mxu0 0
        %674 = vmatpush1.bf16.msra.mxu0 0
        %675 = vmatprep.subr.bf16.mxu0 0
        %676 = vmatpush1.bf16.msra.mxu0 0
        %677 = vmatprep.subr.bf16.mxu0 0
        %678 = vmatpush1.bf16.msra.mxu0 0
        %679 = vmatprep.subr.bf16.mxu0 0
        %680 = vmatpush1.bf16.msra.mxu0 0
        %681 = vmatprep.mubr.bf16.mxu0 0
        %682 = vmatmul.mubr.bf16.gmra.mrb[0].mxu0 %v647
        %v683 = vpop.f32.mrb[0].mxu0
        %v684 = vadd.f32 0.0, %v683
        %v685 = vpop.f32.mrb[0].mxu0
        %v686 = vadd.f32 0.0, %v685
        %v687 = vpop.f32.mrb[0].mxu0
        %v688 = vadd.f32 0.0, %v687
        %v689 = vpop.f32.mrb[0].mxu0
        %v690 = vadd.f32 0.0, %v689
        %691 = vdwg.mxu0
        %692 = vmatprep.subr.bf16.mxu0 %v468
        %693 = vmatpush1.bf16.msra.mxu0 %v467
        %694 = vmatprep.subr.bf16.mxu0 %v472
        %695 = vmatpush1.bf16.msra.mxu0 %v471
        %696 = vmatprep.subr.bf16.mxu0 %v476
        %697 = vmatpush1.bf16.msra.mxu0 %v475
        %698 = vmatprep.subr.bf16.mxu0 %v480
        %699 = vmatpush1.bf16.msra.mxu0 %v479
        %700 = vmatprep.subr.bf16.mxu0 %v484
        %701 = vmatpush1.bf16.msra.mxu0 %v483
        %702 = vmatprep.subr.bf16.mxu0 %v488
        %703 = vmatpush1.bf16.msra.mxu0 %v487
        %704 = vmatprep.subr.bf16.mxu0 %v492
        %705 = vmatpush1.bf16.msra.mxu0 %v491
        %706 = vmatprep.subr.bf16.mxu0 %v496
        %707 = vmatpush1.bf16.msra.mxu0 %v495
        %708 = vmatprep.subr.bf16.mxu0 0
        %709 = vmatpush1.bf16.msra.mxu0 0
        %710 = vmatprep.subr.bf16.mxu0 0
        %711 = vmatpush1.bf16.msra.mxu0 0
        %712 = vmatprep.subr.bf16.mxu0 0
        %713 = vmatpush1.bf16.msra.mxu0 0
        %714 = vmatprep.subr.bf16.mxu0 0
        %715 = vmatpush1.bf16.msra.mxu0 0
        %716 = vmatprep.subr.bf16.mxu0 0
        %717 = vmatpush1.bf16.msra.mxu0 0
        %718 = vmatprep.subr.bf16.mxu0 0
        %719 = vmatpush1.bf16.msra.mxu0 0
        %720 = vmatprep.subr.bf16.mxu0 0
        %721 = vmatpush1.bf16.msra.mxu0 0
        %722 = vmatprep.subr.bf16.mxu0 0
        %723 = vmatpush1.bf16.msra.mxu0 0
        %724 = vmatprep.mubr.bf16.mxu0 0
        %725 = vmatmul.mubr.bf16.gmra.mrb[0].mxu0 %v647
        %v726 = vpop.f32.mrb[0].mxu0
        %v727 = vadd.f32 0.0, %v726
        %v728 = vpop.f32.mrb[0].mxu0
        %v729 = vadd.f32 0.0, %v728
        %v730 = vpop.f32.mrb[0].mxu0
        %v731 = vadd.f32 0.0, %v730
        %v732 = vpop.f32.mrb[0].mxu0
        %v733 = vadd.f32 0.0, %v732
        %734 = vdwg.mxu0
        %v735 = vadd.f32 %v632, %v684
        %v736 = vadd.f32 %v633, %v686
        %v737 = vadd.f32 %v634, %v727
        %v738 = vadd.f32 %v635, %v729
        %v739 = vadd.f32 %v636, %v688
        %v740 = vadd.f32 %v637, %v690
        %v741 = vadd.f32 %v638, %v731
        %v742 = vadd.f32 %v639, %v733
        %743 = vst [vmem:[%s631] sm:$0xff] %v735
        %744 = vst [vmem:[%s631 + $0x8] sm:$0xff] %v736
        %745 = vst [vmem:[%s631 + $0x10] sm:$0xff] %v737
        %746 = vst [vmem:[%s631 + $0x18] sm:$0xff] %v738
        %747 = vst [vmem:[%s631 + $0x20] sm:$0xff] %v739
        %748 = vst [vmem:[%s631 + $0x28] sm:$0xff] %v740
        %749 = vst [vmem:[%s631 + $0x30] sm:$0xff] %v741
        %750 = vst [vmem:[%s631 + $0x38] sm:$0xff] %v742
        %p751 = scmp.eq.s32.totalorder %s30, 2
        // Predicated region
        $region49: #{tpu_custom_call.1} parent=31 // pred_check
          %p752 = pneg %p751
        $region50: #{tpu_custom_call.1} parent=31 // pred_check_branch
          %754 = sbr.rel (%p752) target = $region52
        $region51: #{tpu_custom_call.1} parent=31 // pred_region
          %v755 = vld [vmem:[%s261] sm:$0xf]
          %v756 = vld [vmem:[#allocation2] sm:$0xff]
          %v757 = vld [vmem:[#allocation2 + $0x8] sm:$0xff]
          %v758 = vld [vmem:[#allocation2 + $0x10] sm:$0xff]
          %v759 = vld [vmem:[#allocation2 + $0x18] sm:$0xff]
          %v760 = vld [vmem:[#allocation2 + $0x20] sm:$0xff]
          %v761 = vld [vmem:[#allocation2 + $0x28] sm:$0xff]
          %v762 = vld [vmem:[#allocation2 + $0x30] sm:$0xff]
          %v763 = vld [vmem:[#allocation2 + $0x38] sm:$0xff]
          %v765 = vlaneseq
          %v766 = vshrl.u32 %v765, 7
          %v767 = vsub.s32 0, %v766
          %v768 = vrot.slane %v755, %v767
          %v769 = vlaneseq
          %v770 = vshrl.u32 %v769, 7
          %v771 = vsub.s32 1, %v770
          %v772 = vrot.slane %v755, %v771
          %v773 = vlaneseq
          %v774 = vshrl.u32 %v773, 7
          %v775 = vsub.s32 2, %v774
          %v776 = vrot.slane %v755, %v775
          %v777 = vlaneseq
          %v778 = vshrl.u32 %v777, 7
          %v779 = vsub.s32 3, %v778
          %v780 = vrot.slane %v755, %v779
          %v785 = vadd.f32 %v756, %v768
          %v786 = vadd.f32 %v757, %v772
          %v787 = vadd.f32 %v758, %v776
          %v788 = vadd.f32 %v759, %v780
          %v789 = vadd.f32 %v760, %v768
          %v790 = vadd.f32 %v761, %v772
          %v791 = vadd.f32 %v762, %v776
          %v792 = vadd.f32 %v763, %v780
          %v793 = vmul.f32 %v785, %v785
          %v794 = vmul.f32 %v786, %v786
          %v795 = vmul.f32 %v787, %v787
          %v796 = vmul.f32 %v788, %v788
          %v797 = vmul.f32 %v789, %v789
          %v798 = vmul.f32 %v790, %v790
          %v799 = vmul.f32 %v791, %v791
          %v800 = vmul.f32 %v792, %v792
          %v801 = vadd.f32 %v793, %v794
          %v802 = vadd.f32 %v801, %v795
          %v803 = vadd.f32 %v802, %v796
          %804 = vadd.xlane.f32.xlu0 %v803
          %v805 = vpop.xlane.xlu0 %804
          %v806 = vadd.f32 %v797, %v798
          %v807 = vadd.f32 %v806, %v799
          %v808 = vadd.f32 %v807, %v800
          %809 = vadd.xlane.f32.xlu0 %v808
          %v810 = vpop.xlane.xlu0 %809
          %v811 = vadd.f32 %v805, 1e-12
          %v812 = vadd.f32 %v810, 1e-12
          %v813 = vrsqrt.pop %v811
          %v814 = vrsqrt.pop %v812
          %v815 = vmul.f32 %v785, %v813
          %v816 = vmul.f32 %v786, %v813
          %v817 = vmul.f32 %v787, %v813
          %v818 = vmul.f32 %v788, %v813
          %v819 = vmul.f32 %v789, %v814
          %v820 = vmul.f32 %v790, %v814
          %v821 = vmul.f32 %v791, %v814
          %v822 = vmul.f32 %v792, %v814
          %v823 = vld [vmem:[%s631] sm:$0xff]
          %v824 = vld [vmem:[%s631 + $0x8] sm:$0xff]
          %v825 = vld [vmem:[%s631 + $0x10] sm:$0xff]
          %v826 = vld [vmem:[%s631 + $0x18] sm:$0xff]
          %v827 = vld [vmem:[%s631 + $0x20] sm:$0xff]
          %v828 = vld [vmem:[%s631 + $0x28] sm:$0xff]
          %v829 = vld [vmem:[%s631 + $0x30] sm:$0xff]
          %v830 = vld [vmem:[%s631 + $0x38] sm:$0xff]
          %v831 = vadd.f32 %v823, %v768
          %v832 = vadd.f32 %v824, %v772
          %v833 = vadd.f32 %v825, %v776
          %v834 = vadd.f32 %v826, %v780
          %v835 = vadd.f32 %v827, %v768
          %v836 = vadd.f32 %v828, %v772
          %v837 = vadd.f32 %v829, %v776
          %v838 = vadd.f32 %v830, %v780
          %v839 = vmul.f32 %v831, %v831
          %v840 = vmul.f32 %v832, %v832
          %v841 = vmul.f32 %v833, %v833
          %v842 = vmul.f32 %v834, %v834
          %v843 = vmul.f32 %v835, %v835
          %v844 = vmul.f32 %v836, %v836
          %v845 = vmul.f32 %v837, %v837
          %v846 = vmul.f32 %v838, %v838
          %v847 = vadd.f32 %v839, %v840
          %v848 = vadd.f32 %v847, %v841
          %v849 = vadd.f32 %v848, %v842
          %850 = vadd.xlane.f32.xlu0 %v849
          %v851 = vpop.xlane.xlu0 %850
          %v852 = vadd.f32 %v843, %v844
          %v853 = vadd.f32 %v852, %v845
          %v854 = vadd.f32 %v853, %v846
          %855 = vadd.xlane.f32.xlu0 %v854
          %v856 = vpop.xlane.xlu0 %855
          %v857 = vadd.f32 %v851, 1e-12
          %v858 = vadd.f32 %v856, 1e-12
          %v859 = vrsqrt.pop %v857
          %v860 = vrsqrt.pop %v858
          %v861 = vmul.f32 %v831, %v859
          %v862 = vmul.f32 %v832, %v859
          %v863 = vmul.f32 %v833, %v859
          %v864 = vmul.f32 %v834, %v859
          %v865 = vmul.f32 %v835, %v860
          %v866 = vmul.f32 %v836, %v860
          %v867 = vmul.f32 %v837, %v860
          %v868 = vmul.f32 %v838, %v860
          %v869 = vadd.f32 %v815, %v861
          %v870 = vadd.f32 %v816, %v862
          %v871 = vadd.f32 %v817, %v863
          %v872 = vadd.f32 %v818, %v864
          %v873 = vadd.f32 %v819, %v865
          %v874 = vadd.f32 %v820, %v866
          %v875 = vadd.f32 %v821, %v867
          %v876 = vadd.f32 %v822, %v868
          %v877 = vmul.f32 %v869, %v869
          %v878 = vmul.f32 %v870, %v870
          %v879 = vmul.f32 %v871, %v871
          %v880 = vmul.f32 %v872, %v872
          %v881 = vmul.f32 %v873, %v873
          %v882 = vmul.f32 %v874, %v874
          %v883 = vmul.f32 %v875, %v875
          %v884 = vmul.f32 %v876, %v876
          %v885 = vadd.f32 %v877, %v878
          %v886 = vadd.f32 %v885, %v879
          %v887 = vadd.f32 %v886, %v880
          %888 = vadd.xlane.f32.xlu0 %v887
          %v889 = vpop.xlane.xlu0 %888
          %v890 = vadd.f32 %v881, %v882
          %v891 = vadd.f32 %v890, %v883
          %v892 = vadd.f32 %v891, %v884
          %893 = vadd.xlane.f32.xlu0 %v892
          %v894 = vpop.xlane.xlu0 %893
          %v895 = vadd.f32 %v889, 1e-12
          %v896 = vadd.f32 %v894, 1e-12
          %v897 = vrsqrt.pop %v895
          %v898 = vrsqrt.pop %v896
          %v899 = vmul.f32 %v869, %v897
          %v900 = vmul.f32 %v870, %v897
          %v901 = vmul.f32 %v871, %v897
          %v902 = vmul.f32 %v872, %v897
          %v903 = vmul.f32 %v873, %v898
          %v904 = vmul.f32 %v874, %v898
          %v905 = vmul.f32 %v875, %v898
          %v906 = vmul.f32 %v876, %v898
          %907 = vst [vmem:[%s293] sm:$0xff] %v899
          %908 = vst [vmem:[%s293 + $0x8] sm:$0xff] %v900
          %909 = vst [vmem:[%s293 + $0x10] sm:$0xff] %v901
          %910 = vst [vmem:[%s293 + $0x18] sm:$0xff] %v902
          %911 = vst [vmem:[%s293 + $0x20] sm:$0xff] %v903
          %912 = vst [vmem:[%s293 + $0x28] sm:$0xff] %v904
          %913 = vst [vmem:[%s293 + $0x30] sm:$0xff] %v905
          %914 = vst [vmem:[%s293 + $0x38] sm:$0xff] %v906
        $region52: #{tpu_custom_call.1} parent=31 // pred_fallthru
          _
        %s915 = sand.u32 %s134, 1
        %s916 = scalar_lea.sflag [#allocation5], %s915
        %s917 = sand.u32 %s134, 1
        %s918 = smul.addr %s917, 64
        %s919 = scalar_lea.vmem [#allocation9], %s918
        // Predicated region
        $region53: #{tpu_custom_call.1} parent=31 // pred_check
          %p920 = pneg %p144
        $region54: #{tpu_custom_call.1} parent=31 // pred_check_branch
          %922 = sbr.rel (%p920) target = $region56
        $region55: #{tpu_custom_call.1} parent=31 // pred_region
          %s923 = smul.u32 2, %s28
          %s924 = smul.u32 4, %s29
          %s926 = ssub.s32 1024, 1024
          %927 = vsyncadd %s916, %s926
          %s928 = smul.addr %s923, 8
          %s929 = sadd.s32 %s924, %s928
          %s930 = smul.addr %s929, 128
          %s931 = scalar_lea.hbm %s3, %s930
          %s932 = sshll.u32 %s919, 4
          %s933 = int_to_ptr.vmem [resolvable:$true] %s932
          %938 = dma.vmem_to_hbm [thread:$0]  %s933, 1024, %s931, %s916, 512, 1024, 32
        $region56: #{tpu_custom_call.1} parent=31 // pred_fallthru
          _
      $region32: #{tpu_custom_call.1} parent=5 // pred_fallthru
        _
      %p939 = scmp.le.s32.totalorder 2, %s18
      // Predicated region
      $region57: #{tpu_custom_call.1} parent=5 // pred_check
        %p940 = pneg %p939
      $region58: #{tpu_custom_call.1} parent=5 // pred_check_branch
        %942 = sbr.rel (%p940) target = $region60
      $region59: #{tpu_custom_call.1} parent=5 // pred_region
        %s943 = ssub.s32 %s18, 2
        // Predicated region
        $region61: #{tpu_custom_call.1} parent=59 // pred_check
          %p944 = pneg %p150
        $region62: #{tpu_custom_call.1} parent=59 // pred_check_branch
          %946 = sbr.rel (%p944) target = $region64
        $region63: #{tpu_custom_call.1} parent=59 // pred_region
          %s947 = sand.u32 %s135, 1
          %s948 = scalar_lea.sflag [#allocation5], %s947
          %s949 = sand.u32 %s135, 1
          %s950 = smul.addr %s949, 64
          %s951 = scalar_lea.vmem [#allocation9], %s950
          %952 = dma.done %s948, 1024
        $region64: #{tpu_custom_call.1} parent=59 // pred_fallthru
          _
      $region60: #{tpu_custom_call.1} parent=5 // pred_fallthru
        _
    $region6: #{tpu_custom_call.1} parent=1 // loop_footer
      %s22 = sadd.s32 1, %s18
    $region7: #{tpu_custom_call.1} parent=1 // loop_footer_branch
      %17 = sbr.rel target = $region3
    $region8: #{tpu_custom_call.1} parent=1 // loop_exit
      _
    %953 = vsyncpa [#allocation4], 1
    %s954 = scalar_lea.sflag [#allocation4], 1
    %955 = vsyncpa %s954, 1
    %956 = vsyncpa [#allocation7], 1
    %s957 = scalar_lea.sflag [#allocation7], 1
    %958 = vsyncpa %s957, 1
    %959 = vsyncpa [#allocation5], 1
    %s960 = scalar_lea.sflag [#allocation5], 1
    %961 = vsyncpa %s960, 1

</llo_original>
